<compile_context>
chip_gen: v7x
topology: tpu7x:2x2x1
jax: 0.10.0
libtpu: 0.0.40
codegen_flags: <defaults>
</compile_context>

<pallas_src>
import functools

import jax
import jax.numpy as jnp
from jax import lax
from jax.experimental import pallas as pl
from jax.experimental.pallas import tpu as pltpu


def _round_up(x, m):
    return (x + m - 1) // m * m


# --------------------------------------------------------------------------
# Pallas kernel: in-kernel im2col (static lane-offset slices) + one fused
# lane-dense MXU matmul per batch element.
#   w_ref : (1, Cout, KKC)   bf16  per-batch aggregated weights, (ky,kx,ci) order
#   x_ref : (1, Cin, Pin)    bf16  zero-padded, flattened padded-spatial input
#   b_ref : (1, Cout, 1)     f32   per-batch aggregated bias
#   o_ref : (1, Cout, Pout)  bf16  dense conv response on the padded grid
# --------------------------------------------------------------------------
def _dyn_conv_kernel(w_ref, x_ref, b_ref, o_ref, *, kh, kw, dil, Wp, Pout):
    # Load the per-batch input slab once; slice taps in f32 (clean 8-sublane
    # alignment for the concat), cast to bf16 right before the MXU matmul.
    xp = x_ref[0].astype(jnp.float32)                       # (Cin, Pin)
    taps = []
    for ky in range(kh):
        for kx in range(kw):
            off = ky * dil * Wp + kx * dil                  # static lane offset
            taps.append(xp[:, off:off + Pout])              # (Cin, Pout)
    patches = jnp.concatenate(taps, axis=0)                 # (KKC, Pout), (ky,kx,ci) order
    acc = jnp.dot(w_ref[0], patches.astype(jnp.bfloat16),
                  preferred_element_type=jnp.float32)       # (Cout, Pout) f32 on MXU
    o_ref[0] = (acc + b_ref[0]).astype(o_ref.dtype)         # bias fused, bf16 store


def dyn_conv_pallas(agg_w, x_flat, agg_b, *, kh, kw, dil, Wp, Pout):
    B, Cout, KKC = agg_w.shape
    _, Cin, Pin = x_flat.shape
    kernel = functools.partial(_dyn_conv_kernel, kh=kh, kw=kw, dil=dil,
                               Wp=Wp, Pout=Pout)
    # Per-step VMEM footprint: double-buffered in/out blocks + in-kernel patch tile.
    blk_bytes = (2 * (Cin * Pin * 2 + Cout * KKC * 2 + Cout * 4)    # inputs (x2 buf)
                 + 2 * Cout * Pout * 2                              # output (x2 buf)
                 + KKC * Pout * 4 + Cout * Pout * 4)                # patches + acc
    vmem_limit = int(min(32 << 20, max(16 << 20, 4 * blk_bytes)))   # v7x-safe cap

    return pl.pallas_call(
        kernel,
        out_shape=jax.ShapeDtypeStruct((B, Cout, Pout), jnp.bfloat16),
        grid=(B,),
        in_specs=[
            pl.BlockSpec((1, Cout, KKC), lambda b: (b, 0, 0)),
            pl.BlockSpec((1, Cin, Pin), lambda b: (b, 0, 0)),
            pl.BlockSpec((1, Cout, 1), lambda b: (b, 0, 0)),
        ],
        out_specs=pl.BlockSpec((1, Cout, Pout), lambda b: (b, 0, 0)),
        compiler_params=pltpu.CompilerParams(
            dimension_semantics=("parallel",),
            vmem_limit_bytes=vmem_limit),
    )(agg_w, x_flat, agg_b)


# --------------------------------------------------------------------------
# Full Dynamic_conv2d forward.
# --------------------------------------------------------------------------
def dynamic_conv2d(x, fc1_w, fc2_w, weight, bias, *, stride=1, padding=0,
                   dilation=1, groups=1, temperature=34):
    assert groups == 1  # TODO(synk): groups > 1 not implemented (module default groups=1)
    B, Cin, H, W = x.shape
    K, Cout, _, kh, kw = weight.shape
    KKC = kh * kw * Cin

    # --- attention2d head: a few hundred FLOPs; plain-JAX glue (XLA fuses it) ---
    pooled = jnp.mean(x, axis=(2, 3))                                   # (B, Cin)
    h = jnp.maximum(pooled @ fc1_w.T, 0.0)                              # (B, hidden)
    att = jax.nn.softmax((h @ fc2_w.T) / temperature, axis=-1)          # (B, K)

    # --- per-batch aggregated weights/bias, contraction axis in (ky,kx,ci) order ---
    w_r = jnp.transpose(weight, (0, 1, 3, 4, 2)).reshape(K, Cout * KKC)
    agg_w = (att @ w_r).reshape(B, Cout, KKC).astype(jnp.bfloat16)      # (B, Cout, KKC)
    agg_b = (att @ bias).reshape(B, Cout, 1).astype(jnp.float32)        # (B, Cout, 1)

    # --- output spatial dims ---
    Hp, Wp = H + 2 * padding, W + 2 * padding
    Ho = (H + 2 * padding - dilation * (kh - 1) - 1) // stride + 1
    Wo = (W + 2 * padding - dilation * (kw - 1) - 1) // stride + 1

    # --- input prep: cast to bf16 BEFORE padding, flatten padded spatial dims,
    #     zero-extend the lane axis so every in-kernel tap slice stays in-bounds
    #     and the output slab is a multiple of 128 lanes (unmasked stores). ---
    Pout = _round_up(Hp * Wp, 128)
    maxoff = (kh - 1) * dilation * Wp + (kw - 1) * dilation
    Pin = _round_up(Pout + maxoff, 128)
    xb = jnp.pad(x.astype(jnp.bfloat16),
                 ((0, 0), (0, 0), (padding, padding), (padding, padding)))
    x_flat = jnp.pad(xb.reshape(B, Cin, Hp * Wp),
                     ((0, 0), (0, 0), (0, Pin - Hp * Wp)))              # (B, Cin, Pin)

    # --- one fused, lane-dense matmul per batch element (Pallas kernel) ---
    out_flat = dyn_conv_pallas(agg_w, x_flat, agg_b,
                               kh=kh, kw=kw, dil=dilation, Wp=Wp, Pout=Pout)

    # Kernel produced the dense (unit-stride) response on the padded grid;
    # crop / subsample to the true NCHW output (stride>1 recomputes s^2 extra).
    out = out_flat[:, :, :Hp * Wp].reshape(B, Cout, Hp, Wp)
    out = out[:, :, ::stride, ::stride][:, :, :Ho, :Wo]
    return out                                                          # bf16 NCHW


# --------------------------------------------------------------------------
# Pure-JAX reference (mirrors the PyTorch forward exactly) for verification.
# --------------------------------------------------------------------------
def reference_forward(x, fc1_w, fc2_w, weight, bias, *, stride, padding,
                      dilation, groups, temperature):
    B, Cin, H, W = x.shape
    K, Cout = weight.shape[0], weight.shape[1]
    ksz = weight.shape[-1]
    pooled = jnp.mean(x, axis=(2, 3))
    h = jnp.maximum(pooled @ fc1_w.T, 0.0)
    att = jax.nn.softmax((h @ fc2_w.T) / temperature, axis=1)
    agg_w = (att @ weight.reshape(K, -1)).reshape(B * Cout, Cin // groups, ksz, ksz)
    agg_b = (att @ bias).reshape(-1)
    x_r = x.reshape(1, B * Cin, H, W)
    out = lax.conv_general_dilated(
        x_r, agg_w, (stride, stride), [(padding, padding), (padding, padding)],
        rhs_dilation=(dilation, dilation),
        dimension_numbers=("NCHW", "OIHW", "NCHW"),
        feature_group_count=B * groups,
        precision=lax.Precision.HIGHEST)
    out = out + agg_b[None, :, None, None]
    return out.reshape(B, Cout, out.shape[2], out.shape[3])


if __name__ == "__main__":
    # Module config: Dynamic_conv2d(in_planes=8, out_planes=8, kernel_size=3,
    #                               ratio=0.25, padding=1, K=4, temperature=34)
    B, Cin, H, W = 2, 8, 16, 16
    Cout, ksz, K, ratio, temperature = 8, 3, 4, 0.25, 34
    stride, padding, dilation, groups = 1, 1, 1, 1
    hidden = int(Cin * ratio)  # = 2 (in_planes != 3)

    key = jax.random.PRNGKey(0)
    k1, k2, k3, k4, k5 = jax.random.split(key, 5)
    x = jax.random.normal(k1, (B, Cin, H, W), jnp.float32)
    # deterministic kaiming-style inits (synthetic weights, no checkpoint)
    fc1_w = jax.random.normal(k2, (hidden, Cin), jnp.float32) * jnp.sqrt(2.0 / hidden)
    fc2_w = jax.random.normal(k3, (K, hidden), jnp.float32) * jnp.sqrt(2.0 / K)
    fan_in = Cin * ksz * ksz
    bound = jnp.sqrt(6.0 / fan_in)
    weight = jax.random.uniform(k4, (K, Cout, Cin // groups, ksz, ksz),
                                jnp.float32, -bound, bound)
    bias = jax.random.normal(k5, (K, Cout), jnp.float32) * 0.1

    out = dynamic_conv2d(x, fc1_w, fc2_w, weight, bias, stride=stride,
                         padding=padding, dilation=dilation, groups=groups,
                         temperature=temperature)
    out = jax.block_until_ready(out)

    ref = reference_forward(x, fc1_w, fc2_w, weight, bias, stride=stride,
                            padding=padding, dilation=dilation, groups=groups,
                            temperature=temperature)
    assert out.shape == (B, Cout, H, W), out.shape
    # bf16 MXU operands + bf16 output store (f32 accumulation, contraction dim 72)
    # bound the error well below this tolerance; the reference runs in f32/HIGHEST.
    max_err = float(jnp.max(jnp.abs(out.astype(jnp.float32) - ref)))
    assert max_err < 6e-2, f"mismatch vs reference: max abs err {max_err}"

    print("KERNEL_OK")
</pallas_src>

<mosaic_0001>
module attributes {stable_mosaic.version = 11 : i64} {
  func.func @_dyn_conv_kernel(%arg0: i32, %arg1: memref<1x8x72xbf16, #tpu.memory_space<vmem>>, %arg2: memref<1x8x512xbf16, #tpu.memory_space<vmem>>, %arg3: memref<1x8x1xf32, #tpu.memory_space<vmem>>, %arg4: memref<1x8x384xbf16, #tpu.memory_space<vmem>>) attributes {dimension_semantics = [#tpu.dimension_semantics<parallel>], iteration_bounds = array<i64: 2>, scalar_prefetch = 0 : i64, scratch_operands = 0 : i64, tpu.core_type = #tpu.core_type<tc>, window_params = [{transform_indices = @transform_0, window_bounds = array<i64: 1, 8, 72>}, {transform_indices = @transform_1, window_bounds = array<i64: 1, 8, 512>}, {transform_indices = @transform_2, window_bounds = array<i64: 1, 8, 1>}, {transform_indices = @transform_3, window_bounds = array<i64: 1, 8, 384>}]} {
    %c0 = arith.constant 0 : index
    %c0_0 = arith.constant 0 : index
    %c0_1 = arith.constant 0 : index
    %0 = vector.load %arg2[%c0, %c0_0, %c0_1] : memref<1x8x512xbf16, #tpu.memory_space<vmem>>, vector<1x8x512xbf16>
    %1 = vector.shape_cast %0 : vector<1x8x512xbf16> to vector<8x512xbf16>
    %2 = arith.extf %1 : vector<8x512xbf16> to vector<8x512xf32>
    %3 = vector.extract_strided_slice %2 {offsets = [0, 0], sizes = [8, 384], strides = [1, 1]} : vector<8x512xf32> to vector<8x384xf32>
    %4 = vector.extract_strided_slice %2 {offsets = [0, 1], sizes = [8, 384], strides = [1, 1]} : vector<8x512xf32> to vector<8x384xf32>
    %5 = vector.extract_strided_slice %2 {offsets = [0, 2], sizes = [8, 384], strides = [1, 1]} : vector<8x512xf32> to vector<8x384xf32>
    %6 = vector.extract_strided_slice %2 {offsets = [0, 18], sizes = [8, 384], strides = [1, 1]} : vector<8x512xf32> to vector<8x384xf32>
    %7 = vector.extract_strided_slice %2 {offsets = [0, 19], sizes = [8, 384], strides = [1, 1]} : vector<8x512xf32> to vector<8x384xf32>
    %8 = vector.extract_strided_slice %2 {offsets = [0, 20], sizes = [8, 384], strides = [1, 1]} : vector<8x512xf32> to vector<8x384xf32>
    %9 = vector.extract_strided_slice %2 {offsets = [0, 36], sizes = [8, 384], strides = [1, 1]} : vector<8x512xf32> to vector<8x384xf32>
    %10 = vector.extract_strided_slice %2 {offsets = [0, 37], sizes = [8, 384], strides = [1, 1]} : vector<8x512xf32> to vector<8x384xf32>
    %11 = vector.extract_strided_slice %2 {offsets = [0, 38], sizes = [8, 384], strides = [1, 1]} : vector<8x512xf32> to vector<8x384xf32>
    %12 = tpu.concatenate %3, %4, %5, %6, %7, %8, %9, %10, %11 in 0 : vector<8x384xf32>, vector<8x384xf32>, vector<8x384xf32>, vector<8x384xf32>, vector<8x384xf32>, vector<8x384xf32>, vector<8x384xf32>, vector<8x384xf32>, vector<8x384xf32> -> vector<72x384xf32>
    %c0_2 = arith.constant 0 : index
    %c0_3 = arith.constant 0 : index
    %c0_4 = arith.constant 0 : index
    %13 = vector.load %arg1[%c0_2, %c0_3, %c0_4] : memref<1x8x72xbf16, #tpu.memory_space<vmem>>, vector<1x8x72xbf16>
    %14 = vector.shape_cast %13 : vector<1x8x72xbf16> to vector<8x72xbf16>
    %15 = arith.truncf %12 : vector<72x384xf32> to vector<72x384xbf16>
    %cst = arith.constant dense<0.000000e+00> : vector<8x384xf32>
    %16 = tpu.matmul %14, %15, %cst {dimension_numbers = #tpu.dot_dimension_numbers<[1], [0], [0], [1], [0, 0, 1, 1], [], []>} : vector<8x72xbf16>, vector<72x384xbf16>, vector<8x384xf32> -> vector<8x384xf32>
    %c0_5 = arith.constant 0 : index
    %c0_6 = arith.constant 0 : index
    %c0_7 = arith.constant 0 : index
    %17 = vector.load %arg3[%c0_5, %c0_6, %c0_7] : memref<1x8x1xf32, #tpu.memory_space<vmem>>, vector<1x8x1xf32>
    %18 = vector.shape_cast %17 : vector<1x8x1xf32> to vector<8x1xf32>
    %19 = vector.broadcast %18 : vector<8x1xf32> to vector<8x384xf32>
    %20 = arith.addf %16, %19 : vector<8x384xf32>
    %21 = arith.truncf %20 : vector<8x384xf32> to vector<8x384xbf16>
    %c0_8 = arith.constant 0 : index
    %c0_9 = arith.constant 0 : index
    %c0_10 = arith.constant 0 : index
    %22 = vector.load %arg4[%c0_8, %c0_9, %c0_10] : memref<1x8x384xbf16, #tpu.memory_space<vmem>>, vector<1x8x384xbf16>
    %23 = vector.shape_cast %22 : vector<1x8x384xbf16> to vector<8x384xbf16>
    %24 = vector.shape_cast %21 : vector<8x384xbf16> to vector<1x8x384xbf16>
    tpu.vector_store %arg4[%c0_8, %c0_9, %c0_10], %24 {strides = array<i32>} : memref<1x8x384xbf16, #tpu.memory_space<vmem>>, vector<1x8x384xbf16>,
    return
  }
  func.func @transform_0(%arg0: i32) -> (i32, i32, i32) {
    %c0_i32 = arith.constant 0 : i32
    %c0_i32_0 = arith.constant 0 : i32
    %c0_i32_1 = arith.constant 0 : i32
    return %arg0, %c0_i32, %c0_i32_0 : i32, i32, i32
  }
  func.func @transform_1(%arg0: i32) -> (i32, i32, i32) {
    %c0_i32 = arith.constant 0 : i32
    %c0_i32_0 = arith.constant 0 : i32
    %c0_i32_1 = arith.constant 0 : i32
    return %arg0, %c0_i32, %c0_i32_0 : i32, i32, i32
  }
  func.func @transform_2(%arg0: i32) -> (i32, i32, i32) {
    %c0_i32 = arith.constant 0 : i32
    %c0_i32_0 = arith.constant 0 : i32
    %c0_i32_1 = arith.constant 0 : i32
    return %arg0, %c0_i32, %c0_i32_0 : i32, i32, i32
  }
  func.func @transform_3(%arg0: i32) -> (i32, i32, i32) {
    %c0_i32 = arith.constant 0 : i32
    %c0_i32_0 = arith.constant 0 : i32
    %c0_i32_1 = arith.constant 0 : i32
    return %arg0, %c0_i32, %c0_i32_0 : i32, i32, i32
  }
}

</mosaic_0001>

<llo_original>
// kernel: tpu_custom_call.1
$region0: #{tpu_custom_call.1}
  #allocation0 [shape = 'u32[]', space=smem, size = 0x4, offset = 0x4, fixed_abs, tag = 'smem constant byte address 0x4 - core index']
  #allocation1 [shape = 'u32[144,128]{1,0:T(1,128)}', space=vmem, size = 0x12000, scoped, tag = 'internal scratch']
  %s0 = inlined_call_operand.vmem [shape: bf16[2,8,72], index: 0, kind: input, shape index: {}]
  %s1 = inlined_call_operand.hbm [shape: bf16[2,8,512], index: 1, kind: input, shape index: {}]
  %s2 = inlined_call_operand.vmem [shape: f32[2,8,1], index: 2, kind: input, shape index: {}]
  %s3 = inlined_call_operand.hbm [shape: bf16[2,8,384], index: 3, kind: output, shape index: {}]
  %s4 = sld [smem:[#allocation0]]
  $region49: #{tpu_custom_call.1} parent=0
    _
  %s6 = ssub.s32 1, %s4
  %s7 = scalar_select 0, %s6, %s4
  $region1: #{tpu_custom_call.1} parent=0
    #allocation2 [shape = 'u8[16384]{0}', space=vmem, size = 0x4000, scoped, tag = 'input window, operand 1']
    #allocation3 [shape = 's32[2]{0}', space=sflag, size = 0x8, scoped, tag = 'scoped memory for tpu_custom_call.1']
    #allocation4 [shape = 's32[2]{0}', space=sflag, size = 0x8, scoped, tag = 'scoped memory for tpu_custom_call.1']
    #allocation5 [shape = 'u8[12288]{0}', space=vmem, size = 0x3000, scoped, tag = 'output window, operand 0']
    %8 = vsyncpa [#allocation3], 0
    %s9 = scalar_lea.sflag [#allocation3], 1
    %10 = vsyncpa %s9, 0
    %11 = vsyncpa [#allocation4], 0
    %s12 = scalar_lea.sflag [#allocation4], 1
    %13 = vsyncpa %s12, 0
    loop: start=0, step=1, limit=4
    $region2: #{tpu_custom_call.1} parent=1 // loop_pre_header
      _
    $region3: #{tpu_custom_call.1} parent=1 // loop_header
      %s15 = sphi 0, %s19
      %p16 = scmp.ge.s32.totalorder %s15, 4
      %s25 = sphi 0, %s27
      %s28 = sphi 0, %s25
      %s29 = sphi 0, %s28
      %s45 = sphi 0, %s29
      %s51 = sphi 0, %s53
      %s54 = sphi 0, %s51
      %s55 = sphi 0, %s54
      %s71 = sphi 0, %s55
      %s77 = sphi 0, %s79
      %s80 = sphi 0, %s77
      %s81 = sphi 0, %s80
      %s97 = sphi 0, %s81
      %s103 = sphi 0, %s105
      %s106 = sphi 0, %s103
      %s107 = sphi 0, %s106
      %s123 = sphi 0, %s107
    $region4: #{tpu_custom_call.1} parent=1 // loop_header_branch
      %18 = sbr.rel (%p16) target = $region8
    $region5: #{tpu_custom_call.1} parent=1 // loop_body
      %s20 = ssub.s32 %s15, 1
      %s21 = ssub.s32 %s15, 2
      %s22 = sadd.s32 %s15, 1
      %s23 = ssub.s32 %s15, %s22
      %p24 = scmp.eq.s32.totalorder %s23, 0
      %s26 = sadd.s32 %s25, 1
      %s27 = scalar_select %p24, %s25, %s26
      %p30 = pneg %p24
      %p31 = scmp.eq.s32.totalorder %s15, 1
      %p32 = por %p30, %p31
      %p33 = scmp.ne.s32.totalorder %s25, %s28
      %p34 = scmp.eq.s32.totalorder %s15, 0
      %p35 = por %p33, %p34
      %p36 = scmp.ne.s32.totalorder %s25, %s28
      %p37 = scmp.eq.s32.totalorder %s20, 1
      %p38 = por %p36, %p37
      %p39 = scmp.ne.s32.totalorder %s28, %s29
      %p40 = scmp.eq.s32.totalorder %s20, 0
      %p41 = por %p39, %p40
      %p42 = scmp.ne.s32.totalorder %s28, %s29
      %p43 = scmp.eq.s32.totalorder %s21, 1
      %p44 = por %p42, %p43
      %p46 = scmp.ne.s32.totalorder %s29, %s45
      %p47 = scmp.eq.s32.totalorder %s21, 0
      %p48 = por %p46, %p47
      %s49 = ssub.s32 %s15, %s22
      %p50 = scmp.eq.s32.totalorder %s49, 0
      %s52 = sadd.s32 %s51, 1
      %s53 = scalar_select %p50, %s51, %s52
      %p56 = pneg %p50
      %p57 = scmp.eq.s32.totalorder %s15, 1
      %p58 = por %p56, %p57
      %p59 = scmp.ne.s32.totalorder %s51, %s54
      %p60 = scmp.eq.s32.totalorder %s15, 0
      %p61 = por %p59, %p60
      %p62 = scmp.ne.s32.totalorder %s51, %s54
      %p63 = scmp.eq.s32.totalorder %s20, 1
      %p64 = por %p62, %p63
      %p65 = scmp.ne.s32.totalorder %s54, %s55
      %p66 = scmp.eq.s32.totalorder %s20, 0
      %p67 = por %p65, %p66
      %p68 = scmp.ne.s32.totalorder %s54, %s55
      %p69 = scmp.eq.s32.totalorder %s21, 1
      %p70 = por %p68, %p69
      %p72 = scmp.ne.s32.totalorder %s55, %s71
      %p73 = scmp.eq.s32.totalorder %s21, 0
      %p74 = por %p72, %p73
      %s75 = ssub.s32 %s15, %s22
      %p76 = scmp.eq.s32.totalorder %s75, 0
      %s78 = sadd.s32 %s77, 1
      %s79 = scalar_select %p76, %s77, %s78
      %p82 = pneg %p76
      %p83 = scmp.eq.s32.totalorder %s15, 1
      %p84 = por %p82, %p83
      %p85 = scmp.ne.s32.totalorder %s77, %s80
      %p86 = scmp.eq.s32.totalorder %s15, 0
      %p87 = por %p85, %p86
      %p88 = scmp.ne.s32.totalorder %s77, %s80
      %p89 = scmp.eq.s32.totalorder %s20, 1
      %p90 = por %p88, %p89
      %p91 = scmp.ne.s32.totalorder %s80, %s81
      %p92 = scmp.eq.s32.totalorder %s20, 0
      %p93 = por %p91, %p92
      %p94 = scmp.ne.s32.totalorder %s80, %s81
      %p95 = scmp.eq.s32.totalorder %s21, 1
      %p96 = por %p94, %p95
      %p98 = scmp.ne.s32.totalorder %s81, %s97
      %p99 = scmp.eq.s32.totalorder %s21, 0
      %p100 = por %p98, %p99
      %s101 = ssub.s32 %s15, %s22
      %p102 = scmp.eq.s32.totalorder %s101, 0
      %s104 = sadd.s32 %s103, 1
      %s105 = scalar_select %p102, %s103, %s104
      %p108 = pneg %p102
      %p109 = scmp.eq.s32.totalorder %s15, 1
      %p110 = por %p108, %p109
      %p111 = scmp.ne.s32.totalorder %s103, %s106
      %p112 = scmp.eq.s32.totalorder %s15, 0
      %p113 = por %p111, %p112
      %p114 = scmp.ne.s32.totalorder %s103, %s106
      %p115 = scmp.eq.s32.totalorder %s20, 1
      %p116 = por %p114, %p115
      %p117 = scmp.ne.s32.totalorder %s106, %s107
      %p118 = scmp.eq.s32.totalorder %s20, 0
      %p119 = por %p117, %p118
      %p120 = scmp.ne.s32.totalorder %s106, %s107
      %p121 = scmp.eq.s32.totalorder %s21, 1
      %p122 = por %p120, %p121
      %p124 = scmp.ne.s32.totalorder %s107, %s123
      %p125 = scmp.eq.s32.totalorder %s21, 0
      %p126 = por %p124, %p125
      %p127 = scmp.le.s32.totalorder 1, %s15
      %p128 = scmp.lt.s32.totalorder %s15, 3
      %p129 = pnand %p127, %p128
      %p130 = pneg %p129
      // Predicated region
      $region9: #{tpu_custom_call.1} parent=5 // pred_check
        _
      $region10: #{tpu_custom_call.1} parent=5 // pred_check_branch
        %132 = sbr.rel (%p129) target = $region12
      $region11: #{tpu_custom_call.1} parent=5 // pred_region
        %s133 = ssub.s32 %s15, 1
      $region12: #{tpu_custom_call.1} parent=5 // pred_fallthru
        _
      %p134 = scmp.lt.s32.totalorder %s15, 2
      // Predicated region
      $region13: #{tpu_custom_call.1} parent=5 // pred_check
        %p135 = pneg %p134
      $region14: #{tpu_custom_call.1} parent=5 // pred_check_branch
        %137 = sbr.rel (%p135) target = $region16
      $region15: #{tpu_custom_call.1} parent=5 // pred_region
        // Predicated region
        $region17: #{tpu_custom_call.1} parent=15 // pred_check
          %p138 = pneg %p35
        $region18: #{tpu_custom_call.1} parent=15 // pred_check_branch
          %140 = sbr.rel (%p138) target = $region20
        $region19: #{tpu_custom_call.1} parent=15 // pred_region
          %p141 = scmp.lt.s32.totalorder %s15, 1
          %s142 = scalar_select %p141, %s15, 1
          %s143 = smul.addr %s142, 4
          %s144 = scalar_lea.vmem %s0, %s143
        $region20: #{tpu_custom_call.1} parent=15 // pred_fallthru
          _
        // Predicated region
        $region21: #{tpu_custom_call.1} parent=15 // pred_check
          %p145 = pneg %p61
        $region22: #{tpu_custom_call.1} parent=15 // pred_check_branch
          %147 = sbr.rel (%p145) target = $region24
        $region23: #{tpu_custom_call.1} parent=15 // pred_region
          %s148 = sand.u32 %s51, 1
          %s149 = scalar_lea.sflag [#allocation3], %s148
          %s150 = sand.u32 %s51, 1
          %s151 = smul.addr %s150, 16
          %s152 = scalar_lea.vmem [#allocation2], %s151
          %s154 = ssub.s32 256, 256
          %155 = vsyncadd %s149, %s154
          %s156 = smul.addr %s15, 4
          %s157 = smul.addr %s156, 64
          %s158 = scalar_lea.hbm %s1, %s157
          %s160 = sshll.u32 %s152, 4
          %s161 = int_to_ptr.vmem [resolvable:$true] %s160
          %163 = dma.hbm_to_vmem [thread:$0]  %s158, 256, %s161, %s149
        $region24: #{tpu_custom_call.1} parent=15 // pred_fallthru
          _
        // Predicated region
        $region25: #{tpu_custom_call.1} parent=15 // pred_check
          %p164 = pneg %p87
        $region26: #{tpu_custom_call.1} parent=15 // pred_check_branch
          %166 = sbr.rel (%p164) target = $region28
        $region27: #{tpu_custom_call.1} parent=15 // pred_region
          %p167 = scmp.lt.s32.totalorder %s15, 1
          %s168 = scalar_select %p167, %s15, 1
          %s169 = smul.addr %s168, 8
          %s170 = scalar_lea.vmem %s2, %s169
        $region28: #{tpu_custom_call.1} parent=15 // pred_fallthru
          _
      $region16: #{tpu_custom_call.1} parent=5 // pred_fallthru
        _
      %p171 = scmp.le.s32.totalorder 1, %s15
      %p172 = scmp.lt.s32.totalorder %s15, 3
      %p173 = pnand %p171, %p172
      %p174 = pneg %p173
      // Predicated region
      $region29: #{tpu_custom_call.1} parent=5 // pred_check
        _
      $region30: #{tpu_custom_call.1} parent=5 // pred_check_branch
        %176 = sbr.rel (%p173) target = $region32
      $region31: #{tpu_custom_call.1} parent=5 // pred_region
        %s177 = ssub.s32 %s15, 1
        %s178 = sand.u32 %s54, 1
        %s179 = scalar_lea.sflag [#allocation3], %s178
        %s180 = sand.u32 %s54, 1
        %s181 = smul.addr %s180, 16
        %s182 = scalar_lea.vmem [#allocation2], %s181
        // Predicated region
        $region33: #{tpu_custom_call.1} parent=31 // pred_check
          %p183 = pneg %p67
        $region34: #{tpu_custom_call.1} parent=31 // pred_check_branch
          %185 = sbr.rel (%p183) target = $region36
        $region35: #{tpu_custom_call.1} parent=31 // pred_region
          %186 = dma.done %s179, 256
        $region36: #{tpu_custom_call.1} parent=31 // pred_fallthru
          _
        %p187 = scmp.lt.s32.totalorder %s20, 1
        %s188 = scalar_select %p187, %s20, 1
        %s189 = smul.addr %s188, 4
        %s190 = scalar_lea.vmem %s0, %s189
        %p191 = pneg %p41
        %p192 = pneg %p38
        %s193 = sand.u32 %s54, 1
        %s194 = scalar_lea.sflag [#allocation3], %s193
        %s195 = sand.u32 %s54, 1
        %s196 = smul.addr %s195, 16
        %s197 = scalar_lea.vmem [#allocation2], %s196
        %p198 = pneg %p67
        %p199 = pneg %p64
        %p200 = scmp.lt.s32.totalorder %s20, 1
        %s201 = scalar_select %p200, %s20, 1
        %s202 = smul.addr %s201, 8
        %s203 = scalar_lea.vmem %s2, %s202
        %p204 = pneg %p93
        %p205 = pneg %p90
        %p206 = pneg %p119
        %p207 = pneg %p116
        %s208 = sand.u32 %s106, 1
        %s209 = scalar_lea.sflag [#allocation4], %s208
        %s210 = sand.u32 %s106, 1
        %s211 = smul.addr %s210, 12
        %s212 = scalar_lea.vmem [#allocation5], %s211
        %p213 = scmp.lt.s32.totalorder %s20, 1
        %s214 = scalar_select %p213, %s20, 1
        %s215 = smul.addr %s214, 4
        %s216 = scalar_lea.vmem %s0, %s215
        %p217 = scmp.lt.s32.totalorder %s20, 1
        %s218 = scalar_select %p217, %s20, 1
        %s219 = smul.addr %s218, 8
        %s220 = scalar_lea.vmem %s2, %s219
        %v222 = vld [vmem:[%s182] sm:$0xff]
        %v223 = vld [vmem:[%s182 + $0x8] sm:$0xff]
        %v224 = vunpack.c.l.bf16 %v222
        %v225 = vunpack.c.h.bf16 %v222
        %v226 = vunpack.c.l.bf16 %v223
        %v227 = vunpack.c.h.bf16 %v223
        %232 = vrot.lane.b32.xlu0 %v224, 127
        %v233 = vpop.permute.xlu0 %232
        %234 = vrot.lane.b32.xlu0 %v225, 127
        %v235 = vpop.permute.xlu0 %234
        %236 = vrot.lane.b32.xlu0 %v226, 127
        %v237 = vpop.permute.xlu0 %236
        %238 = vrot.lane.b32.xlu0 %v227, 127
        %v239 = vpop.permute.xlu0 %238
        %vm240 = vcmask 1039360
        %v241 = vsel %vm240, %v233, %v235
        %v242 = vsel %vm240, %v235, %v237
        %v243 = vsel %vm240, %v237, %v239
        %247 = vrot.lane.b32.xlu0 %v224, 126
        %v248 = vpop.permute.xlu0 %247
        %249 = vrot.lane.b32.xlu0 %v225, 126
        %v250 = vpop.permute.xlu0 %249
        %251 = vrot.lane.b32.xlu0 %v226, 126
        %v252 = vpop.permute.xlu0 %251
        %253 = vrot.lane.b32.xlu0 %v227, 126
        %v254 = vpop.permute.xlu0 %253
        %vm255 = vcmask 1031168
        %v256 = vsel %vm255, %v248, %v250
        %v257 = vsel %vm255, %v250, %v252
        %v258 = vsel %vm255, %v252, %v254
        %262 = vrot.lane.b32.xlu0 %v224, 110
        %v263 = vpop.permute.xlu0 %262
        %264 = vrot.lane.b32.xlu0 %v225, 110
        %v265 = vpop.permute.xlu0 %264
        %266 = vrot.lane.b32.xlu0 %v226, 110
        %v267 = vpop.permute.xlu0 %266
        %268 = vrot.lane.b32.xlu0 %v227, 110
        %v269 = vpop.permute.xlu0 %268
        %vm270 = vcmask 900096
        %v271 = vsel %vm270, %v263, %v265
        %v272 = vsel %vm270, %v265, %v267
        %v273 = vsel %vm270, %v267, %v269
        %277 = vrot.lane.b32.xlu0 %v224, 109
        %v278 = vpop.permute.xlu0 %277
        %279 = vrot.lane.b32.xlu0 %v225, 109
        %v280 = vpop.permute.xlu0 %279
        %281 = vrot.lane.b32.xlu0 %v226, 109
        %v282 = vpop.permute.xlu0 %281
        %283 = vrot.lane.b32.xlu0 %v227, 109
        %v284 = vpop.permute.xlu0 %283
        %vm285 = vcmask 891904
        %v286 = vsel %vm285, %v278, %v280
        %v287 = vsel %vm285, %v280, %v282
        %v288 = vsel %vm285, %v282, %v284
        %292 = vrot.lane.b32.xlu0 %v224, 108
        %v293 = vpop.permute.xlu0 %292
        %294 = vrot.lane.b32.xlu0 %v225, 108
        %v295 = vpop.permute.xlu0 %294
        %296 = vrot.lane.b32.xlu0 %v226, 108
        %v297 = vpop.permute.xlu0 %296
        %298 = vrot.lane.b32.xlu0 %v227, 108
        %v299 = vpop.permute.xlu0 %298
        %vm300 = vcmask 883712
        %v301 = vsel %vm300, %v293, %v295
        %v302 = vsel %vm300, %v295, %v297
        %v303 = vsel %vm300, %v297, %v299
        %307 = vrot.lane.b32.xlu0 %v224, 92
        %v308 = vpop.permute.xlu0 %307
        %309 = vrot.lane.b32.xlu0 %v225, 92
        %v310 = vpop.permute.xlu0 %309
        %311 = vrot.lane.b32.xlu0 %v226, 92
        %v312 = vpop.permute.xlu0 %311
        %313 = vrot.lane.b32.xlu0 %v227, 92
        %v314 = vpop.permute.xlu0 %313
        %vm315 = vcmask 752640
        %v316 = vsel %vm315, %v308, %v310
        %v317 = vsel %vm315, %v310, %v312
        %v318 = vsel %vm315, %v312, %v314
        %322 = vrot.lane.b32.xlu0 %v224, 91
        %v323 = vpop.permute.xlu0 %322
        %324 = vrot.lane.b32.xlu0 %v225, 91
        %v325 = vpop.permute.xlu0 %324
        %326 = vrot.lane.b32.xlu0 %v226, 91
        %v327 = vpop.permute.xlu0 %326
        %328 = vrot.lane.b32.xlu0 %v227, 91
        %v329 = vpop.permute.xlu0 %328
        %vm330 = vcmask 744448
        %v331 = vsel %vm330, %v323, %v325
        %v332 = vsel %vm330, %v325, %v327
        %v333 = vsel %vm330, %v327, %v329
        %337 = vrot.lane.b32.xlu0 %v224, 90
        %v338 = vpop.permute.xlu0 %337
        %339 = vrot.lane.b32.xlu0 %v225, 90
        %v340 = vpop.permute.xlu0 %339
        %341 = vrot.lane.b32.xlu0 %v226, 90
        %v342 = vpop.permute.xlu0 %341
        %343 = vrot.lane.b32.xlu0 %v227, 90
        %v344 = vpop.permute.xlu0 %343
        %vm345 = vcmask 736256
        %v346 = vsel %vm345, %v338, %v340
        %v347 = vsel %vm345, %v340, %v342
        %v348 = vsel %vm345, %v342, %v344
        %v352 = vld [vmem:[%s216] sm:$0xf]
        %v353 = vpack.c.bf16 %v241, %v224
        %v354 = vpack.c.bf16 %v242, %v225
        %v355 = vpack.c.bf16 %v243, %v226
        %v356 = vpack.c.bf16 %v271, %v256
        %v357 = vpack.c.bf16 %v272, %v257
        %v358 = vpack.c.bf16 %v273, %v258
        %v359 = vpack.c.bf16 %v301, %v286
        %v360 = vpack.c.bf16 %v302, %v287
        %v361 = vpack.c.bf16 %v303, %v288
        %v362 = vpack.c.bf16 %v331, %v316
        %v363 = vpack.c.bf16 %v332, %v317
        %v364 = vpack.c.bf16 %v333, %v318
        %v365 = vpack.c.bf16 %v346, %v346
        %v366 = vpack.c.bf16 %v347, %v347
        %v367 = vpack.c.bf16 %v348, %v348
        %v368 = vld [vmem:[%s220] sm:$0xff]
        %370 = vset.pattern.permute.xlu0 0
        %371 = vperm.xlu0 %370, %v368
        %v372 = vpop.permute.xlu0 %371
        %vm374 = vcmask 588800
        %v376 = vsel %vm374, %v352, 0
        %vm378 = vcmask 1043456
        %v380 = vsel %vm378, %v365, 0
        %v383 = vsel %vm378, %v366, 0
        %v386 = vsel %vm378, %v367, 0
        %388 = vmatprep.subr.bf16.mxu0 %v354
        %389 = vmatpush1.bf16.msra.mxu0 %v353
        %390 = vmatprep.subr.bf16.mxu0 %v357
        %391 = vmatpush1.bf16.msra.mxu0 %v356
        %392 = vmatprep.subr.bf16.mxu0 %v360
        %393 = vmatpush1.bf16.msra.mxu0 %v359
        %394 = vmatprep.subr.bf16.mxu0 %v363
        %395 = vmatpush1.bf16.msra.mxu0 %v362
        %396 = vmatprep.subr.bf16.mxu0 %v383
        %397 = vmatpush1.bf16.msra.mxu0 %v380
        %398 = vmatprep.subr.bf16.mxu0 0
        %399 = vmatpush1.bf16.msra.mxu0 0
        %400 = vmatprep.subr.bf16.mxu0 0
        %401 = vmatpush1.bf16.msra.mxu0 0
        %402 = vmatprep.subr.bf16.mxu0 0
        %403 = vmatpush1.bf16.msra.mxu0 0
        %404 = vmatprep.subr.bf16.mxu0 0
        %405 = vmatpush1.bf16.msra.mxu0 0
        %406 = vmatprep.subr.bf16.mxu0 0
        %407 = vmatpush1.bf16.msra.mxu0 0
        %408 = vmatprep.subr.bf16.mxu0 0
        %409 = vmatpush1.bf16.msra.mxu0 0
        %410 = vmatprep.subr.bf16.mxu0 0
        %411 = vmatpush1.bf16.msra.mxu0 0
        %412 = vmatprep.subr.bf16.mxu0 0
        %413 = vmatpush1.bf16.msra.mxu0 0
        %414 = vmatprep.subr.bf16.mxu0 0
        %415 = vmatpush1.bf16.msra.mxu0 0
        %416 = vmatprep.subr.bf16.mxu0 0
        %417 = vmatpush1.bf16.msra.mxu0 0
        %418 = vmatprep.subr.bf16.mxu0 0
        %419 = vmatpush1.bf16.msra.mxu0 0
        %420 = vmatprep.mubr.bf16.mxu0 0
        %421 = vmatmul.mubr.bf16.gmra.mrb[0].mxu0 %v376
        %v422 = vpop.f32.mrb[0].mxu0
        %v423 = vadd.f32 %v372, %v422
        %v424 = vpop.f32.mrb[0].mxu0
        %v425 = vadd.f32 %v372, %v424
        %v426 = vpop.f32.mrb[0].mxu0
        %v427 = vpop.f32.mrb[0].mxu0
        %428 = vdwg.mxu0
        %429 = vmatprep.subr.bf16.mxu0 0
        %430 = vmatpush1.bf16.msra.mxu0 %v355
        %431 = vmatprep.subr.bf16.mxu0 0
        %432 = vmatpush1.bf16.msra.mxu0 %v358
        %433 = vmatprep.subr.bf16.mxu0 0
        %434 = vmatpush1.bf16.msra.mxu0 %v361
        %435 = vmatprep.subr.bf16.mxu0 0
        %436 = vmatpush1.bf16.msra.mxu0 %v364
        %437 = vmatprep.subr.bf16.mxu0 0
        %438 = vmatpush1.bf16.msra.mxu0 %v386
        %439 = vmatprep.subr.bf16.mxu0 0
        %440 = vmatpush1.bf16.msra.mxu0 0
        %441 = vmatprep.subr.bf16.mxu0 0
        %442 = vmatpush1.bf16.msra.mxu0 0
        %443 = vmatprep.subr.bf16.mxu0 0
        %444 = vmatpush1.bf16.msra.mxu0 0
        %445 = vmatprep.subr.bf16.mxu0 0
        %446 = vmatpush1.bf16.msra.mxu0 0
        %447 = vmatprep.subr.bf16.mxu0 0
        %448 = vmatpush1.bf16.msra.mxu0 0
        %449 = vmatprep.subr.bf16.mxu0 0
        %450 = vmatpush1.bf16.msra.mxu0 0
        %451 = vmatprep.subr.bf16.mxu0 0
        %452 = vmatpush1.bf16.msra.mxu0 0
        %453 = vmatprep.subr.bf16.mxu0 0
        %454 = vmatpush1.bf16.msra.mxu0 0
        %455 = vmatprep.subr.bf16.mxu0 0
        %456 = vmatpush1.bf16.msra.mxu0 0
        %457 = vmatprep.subr.bf16.mxu0 0
        %458 = vmatpush1.bf16.msra.mxu0 0
        %459 = vmatprep.subr.bf16.mxu0 0
        %460 = vmatpush1.bf16.msra.mxu0 0
        %461 = vmatprep.mubr.bf16.mxu0 0
        %462 = vmatmul.mubr.bf16.gmra.mrb[0].mxu0 %v376
        %v463 = vpop.f32.mrb[0].mxu0
        %v464 = vadd.f32 %v372, %v463
        %v465 = vpop.f32.mrb[0].mxu0
        %v466 = vpop.f32.mrb[0].mxu0
        %v467 = vpop.f32.mrb[0].mxu0
        %468 = vdwg.mxu0
        %v469 = vpack.c.bf16 %v423, %v423
        %v470 = vpack.c.bf16 %v425, %v425
        %v471 = vpack.c.bf16 %v464, %v464
        %v475 = vunpack.c.l.b16 %v469
        %v476 = vunpack.c.l.b16 %v470
        %v477 = vunpack.c.l.b16 %v471
        %v478 = vpack.c.b16 %v476, %v475
        %v479 = vpack.c.b16 %v477, %v477
        %482 = vst [vmem:[%s212] sm:$0xff] %v478
        %483 = vst [vmem:[%s212 + $0x8] sm:$0xf] %v479
        %s484 = sand.u32 %s106, 1
        %s485 = scalar_lea.sflag [#allocation4], %s484
        %s486 = sand.u32 %s106, 1
        %s487 = smul.addr %s486, 12
        %s488 = scalar_lea.vmem [#allocation5], %s487
        // Predicated region
        $region37: #{tpu_custom_call.1} parent=31 // pred_check
          %p489 = pneg %p116
        $region38: #{tpu_custom_call.1} parent=31 // pred_check_branch
          %491 = sbr.rel (%p489) target = $region40
        $region39: #{tpu_custom_call.1} parent=31 // pred_region
          %s493 = ssub.s32 192, 192
          %494 = vsyncadd %s485, %s493
          %s495 = smul.addr %s20, 3
          %s496 = smul.addr %s495, 64
          %s497 = scalar_lea.hbm %s3, %s496
          %s499 = sshll.u32 %s488, 4
          %s500 = int_to_ptr.vmem [resolvable:$true] %s499
          %502 = dma.vmem_to_hbm [thread:$0]  %s500, 192, %s497, %s485
        $region40: #{tpu_custom_call.1} parent=31 // pred_fallthru
          _
      $region32: #{tpu_custom_call.1} parent=5 // pred_fallthru
        _
      %p503 = scmp.le.s32.totalorder 2, %s15
      // Predicated region
      $region41: #{tpu_custom_call.1} parent=5 // pred_check
        %p504 = pneg %p503
      $region42: #{tpu_custom_call.1} parent=5 // pred_check_branch
        %506 = sbr.rel (%p504) target = $region44
      $region43: #{tpu_custom_call.1} parent=5 // pred_region
        %s507 = ssub.s32 %s15, 2
        // Predicated region
        $region45: #{tpu_custom_call.1} parent=43 // pred_check
          %p508 = pneg %p122
        $region46: #{tpu_custom_call.1} parent=43 // pred_check_branch
          %510 = sbr.rel (%p508) target = $region48
        $region47: #{tpu_custom_call.1} parent=43 // pred_region
          %s511 = sand.u32 %s107, 1
          %s512 = scalar_lea.sflag [#allocation4], %s511
          %s513 = sand.u32 %s107, 1
          %s514 = smul.addr %s513, 12
          %s515 = scalar_lea.vmem [#allocation5], %s514
          %516 = dma.done %s512, 192
        $region48: #{tpu_custom_call.1} parent=43 // pred_fallthru
          _
      $region44: #{tpu_custom_call.1} parent=5 // pred_fallthru
        _
    $region6: #{tpu_custom_call.1} parent=1 // loop_footer
      %s19 = sadd.s32 1, %s15
    $region7: #{tpu_custom_call.1} parent=1 // loop_footer_branch
      %14 = sbr.rel target = $region3
    $region8: #{tpu_custom_call.1} parent=1 // loop_exit
      _
    %517 = vsyncpa [#allocation3], 1
    %s518 = scalar_lea.sflag [#allocation3], 1
    %519 = vsyncpa %s518, 1
    %520 = vsyncpa [#allocation4], 1
    %s521 = scalar_lea.sflag [#allocation4], 1
    %522 = vsyncpa %s521, 1

</llo_original>
